<compile_context>
chip_gen: v5e
topology: v5e:2x2
jax: 0.10.0
libtpu: 0.0.40
codegen_flags: <defaults>
</compile_context>

<pallas_src>
import math
import functools

import jax
import jax.numpy as jnp
from jax import lax
from jax.experimental import pallas as pl
from jax.experimental.pallas import tpu as pltpu

# Scoped-VMEM budget: above the 16/32 MiB defaults, below v7x's 64 MiB physical.
_VMEM_LIMIT_BYTES = 48 * 1024 * 1024


# ----------------------------- Linear (GEMM) --------------------------------
def _linear_kernel(x_ref, w_ref, b_ref, o_ref):
    # x: (TM, D_in), w: (D_in, D_out) [bf16], b: (1, D_out)
    x = x_ref[...].astype(jnp.bfloat16)
    w = w_ref[...].astype(jnp.bfloat16)
    acc = jnp.dot(x, w, preferred_element_type=jnp.float32)
    o_ref[...] = (acc + b_ref[...].astype(jnp.float32)).astype(o_ref.dtype)


def _pick_row_tile(n, target=512):
    """Row tile: full array if small, else a fixed multiple-of-8 target.

    The grid uses pl.cdiv, so a ragged last tile is handled by masked
    writeback instead of searching for an exact divisor.
    """
    return n if n <= target else target


def pallas_linear(x, w, b, *, row_tile=512):
    """x: (N, D_in) @ w: (D_in, D_out) + b: (D_out,) -> (N, D_out).

    Row-tiled pipelined GEMM; weight/bias are resident (constant index map)
    across row tiles and fed to the MXU in bf16 with f32 accumulation.
    """
    n, d_in = x.shape
    d_out = w.shape[1]
    tm = _pick_row_tile(n, row_tile)
    w_bf16 = w.astype(jnp.bfloat16)          # halves weight HBM/VMEM traffic
    b2 = b.reshape(1, d_out).astype(jnp.float32)
    return pl.pallas_call(
        _linear_kernel,
        out_shape=jax.ShapeDtypeStruct((n, d_out), x.dtype),
        grid=(pl.cdiv(n, tm),),
        in_specs=[
            pl.BlockSpec((tm, d_in), lambda i: (i, 0)),
            pl.BlockSpec((d_in, d_out), lambda i: (0, 0)),
            pl.BlockSpec((1, d_out), lambda i: (0, 0)),
        ],
        out_specs=pl.BlockSpec((tm, d_out), lambda i: (i, 0)),
        compiler_params=pltpu.CompilerParams(
            dimension_semantics=("parallel",),
            vmem_limit_bytes=_VMEM_LIMIT_BYTES,
        ),
    )(x, w_bf16, b2)


# ------------------- memory_querying_responding kernel ----------------------
def _mtm_attn_kernel(q_ref, k_ref, v_ref, o_ref, *, h, topk, d_k):
    # q: (tq, d_model) query tile, k/v: (Lk, d_model), one batch element.
    tq = q_ref.shape[0]
    lk = k_ref.shape[0]
    scale = 1.0 / math.sqrt(d_k)
    neg = jnp.float32(-1e30)

    # Split heads ONCE into a batched (h, ·, d_k) layout; MXU operands in bf16.
    q = (q_ref[...].astype(jnp.float32) * scale).astype(jnp.bfloat16)
    q = jnp.transpose(q.reshape(tq, h, d_k), (1, 0, 2))                     # (h, tq, d_k)
    k = jnp.transpose(k_ref[...].astype(jnp.bfloat16).reshape(lk, h, d_k),
                      (1, 0, 2))                                            # (h, lk, d_k)
    v = jnp.transpose(v_ref[...].astype(jnp.bfloat16).reshape(lk, h, d_k),
                      (1, 0, 2))                                            # (h, lk, d_k)

    # Batched per-head scores (contraction on d_k -> no k transpose), f32 acc.
    scores = jnp.einsum("hqd,hkd->hqk", q, k,
                        preferred_element_type=jnp.float32)                 # (h, tq, lk)

    # k-th largest score per (head, query) row via knockout over ALL heads at
    # once: one XLU reduce per iteration instead of h serialized chains.
    running = scores
    thr = scores
    for _ in range(topk):
        thr = jnp.max(running, axis=-1, keepdims=True)
        running = jnp.where(running >= thr, neg, running)

    # Masked softmax over the selected scores; non-selected keys -> weight 0.
    masked = jnp.where(scores >= thr, scores, neg)
    m = jnp.max(masked, axis=-1, keepdims=True)
    p = jnp.exp(masked - m)
    p = p * pl.reciprocal(jnp.sum(p, axis=-1, keepdims=True), approx=True)

    # Weighted sum of selected values, batched over heads, f32 accumulation.
    out = jnp.einsum("hqk,hkd->hqd", p.astype(jnp.bfloat16), v,
                     preferred_element_type=jnp.float32)                    # (h, tq, d_k)

    # Merge heads -> single lane-dense (tq, d_model) store.
    merged = jnp.transpose(out, (1, 0, 2)).reshape(tq, h * d_k)
    o_ref[...] = merged.astype(o_ref.dtype)


def _pick_q_tile(lq, target=64):
    """Query tile: full Lq if small, else a multiple-of-8 target that keeps the
    live f32 (tq, Lk) score temporaries within v7x's 64 MiB VMEM."""
    return lq if lq <= target else target


def mtm_attention(q, k, v, *, h, topk):
    """q: (B, Lq, d_model), k/v: (B, Lk, d_model) -> (B, Lq, d_model)."""
    B, Lq, d_model = q.shape
    Lk = k.shape[1]
    assert d_model % h == 0
    d_k = d_model // h
    tq = _pick_q_tile(Lq)
    kernel = functools.partial(_mtm_attn_kernel, h=h, topk=topk, d_k=d_k)
    return pl.pallas_call(
        kernel,
        out_shape=jax.ShapeDtypeStruct((B, Lq, d_model), q.dtype),
        grid=(B, pl.cdiv(Lq, tq)),
        in_specs=[
            pl.BlockSpec((None, tq, d_model), lambda b, i: (b, i, 0)),
            pl.BlockSpec((None, Lk, d_model), lambda b, i: (b, 0, 0)),  # resident per batch
            pl.BlockSpec((None, Lk, d_model), lambda b, i: (b, 0, 0)),  # resident per batch
        ],
        out_specs=pl.BlockSpec((None, tq, d_model), lambda b, i: (b, i, 0)),
        compiler_params=pltpu.CompilerParams(
            dimension_semantics=("parallel", "parallel"),
            vmem_limit_bytes=_VMEM_LIMIT_BYTES,
        ),
    )(q, k, v)


# --------------------------- full forward pass -------------------------------
def multi_thread_memory_forward(params, query, key, value, *, h, topk):
    """MultiThreadMemory.forward with mask=None, layer_past=None (eval mode)."""
    B, Lq, d_model = query.shape
    Lk = key.shape[1]
    assert topk <= Lk

    (wq, bq), (wk, bk), (wv, bv), (wo, bo) = params

    q = pallas_linear(query.reshape(B * Lq, d_model), wq, bq).reshape(B, Lq, d_model)

    if value is key:
        # Common MultiThreadMemory call pattern (key == value == memory):
        # fused K/V projection reads the activation from HBM once and widens
        # the GEMM's N dimension.
        wkv = jnp.concatenate([wk, wv], axis=1)
        bkv = jnp.concatenate([bk, bv], axis=0)
        kv = pallas_linear(key.reshape(B * Lk, d_model), wkv, bkv)
        k = kv[:, :d_model].reshape(B, Lk, d_model)
        v = kv[:, d_model:].reshape(B, Lk, d_model)
    else:
        k = pallas_linear(key.reshape(B * Lk, d_model), wk, bk).reshape(B, Lk, d_model)
        v = pallas_linear(value.reshape(B * Lk, d_model), wv, bv).reshape(B, Lk, d_model)

    # Heads are split/merged inside the attention kernel; output comes back in
    # merged-head (B, Lq, d_model) layout (no HBM transposes).
    x = mtm_attention(q, k, v, h=h, topk=topk)

    out = pallas_linear(x.reshape(B * Lq, d_model), wo, bo).reshape(B, Lq, d_model)
    return out


# ------------------------- pure-JAX reference --------------------------------
def multi_thread_memory_reference(params, query, key, value, *, h, topk):
    """Pure-JAX reference mirroring the module (and the kernel's bf16 MXU
    operands), using real top_k + gather like the PyTorch code."""
    B, Lq, d_model = query.shape
    Lk = key.shape[1]
    d_k = d_model // h
    scale = 1.0 / math.sqrt(d_k)
    (wq, bq), (wk, bk), (wv, bv), (wo, bo) = params

    def linear(x, w, b):
        y = jnp.dot(x.astype(jnp.bfloat16), w.astype(jnp.bfloat16),
                    preferred_element_type=jnp.float32)
        return (y + b.astype(jnp.float32)).astype(x.dtype)

    q = linear(query.reshape(-1, d_model), wq, bq).reshape(B, Lq, d_model)
    k = linear(key.reshape(-1, d_model), wk, bk).reshape(B, Lk, d_model)
    v = linear(value.reshape(-1, d_model), wv, bv).reshape(B, Lk, d_model)

    def split(x):
        L = x.shape[1]
        return jnp.transpose(x.reshape(B, L, h, d_k), (0, 2, 1, 3))  # (B,h,L,d_k)

    qh, kh, vh = split(q), split(k), split(v)
    scores = jnp.einsum("bhqd,bhkd->bhqk",
                        (qh * scale).astype(jnp.bfloat16), kh.astype(jnp.bfloat16),
                        preferred_element_type=jnp.float32)
    sel, idx = lax.top_k(scores, topk)                                # (B,h,Lq,topk)
    p = jax.nn.softmax(sel, axis=-1)
    sel_v = jnp.take_along_axis(vh[:, :, None, :, :], idx[..., None], axis=3)
    out = jnp.einsum("bhqk,bhqkd->bhqd",
                     p.astype(jnp.bfloat16), sel_v.astype(jnp.bfloat16),
                     preferred_element_type=jnp.float32)
    x = jnp.transpose(out, (0, 2, 1, 3)).reshape(B, Lq, d_model).astype(query.dtype)
    return linear(x.reshape(-1, d_model), wo, bo).reshape(B, Lq, d_model)


def init_params(key, d_model):
    """Deterministic init of the 4 Linear(d_model, d_model) layers.

    Weights stored as (in_features, out_features): y = x @ W + b."""
    params = []
    bound = 1.0 / math.sqrt(d_model)
    for i in range(4):
        kw, kb = jax.random.split(jax.random.fold_in(key, i))
        w = jax.random.uniform(kw, (d_model, d_model), jnp.float32,
                               minval=-bound, maxval=bound)
        b = jax.random.uniform(kb, (d_model,), jnp.float32,
                               minval=-bound, maxval=bound)
        params.append((w, b))
    return params


if __name__ == "__main__":
    # Small, module-consistent shapes.
    B = 2          # batch
    Lq = 8         # query sequence length
    Lk = 16        # memory (key/value) length
    d_model = 32   # hidden size
    h = 4          # heads -> d_k = 8
    topk = 8       # top-k memory slots per query (<= Lk)

    root = jax.random.PRNGKey(0)
    k_params, k_q, k_m = jax.random.split(root, 3)

    params = init_params(k_params, d_model)
    query = jax.random.normal(k_q, (B, Lq, d_model), jnp.float32)
    memory = jax.random.normal(k_m, (B, Lk, d_model), jnp.float32)

    # key == value == memory (the module's common call pattern; exercises the
    # fused K/V projection path).
    out = multi_thread_memory_forward(params, query, memory, memory, h=h, topk=topk)
    out = jax.block_until_ready(out)
    assert out.shape == (B, Lq, d_model)
    assert bool(jnp.all(jnp.isfinite(out)))

    ref = multi_thread_memory_reference(params, query, memory, memory, h=h, topk=topk)
    ref = jax.block_until_ready(ref)
    max_err = float(jnp.max(jnp.abs(out - ref)))
    assert max_err < 5e-2, f"kernel/reference mismatch: max abs err = {max_err}"

    print("KERNEL_OK")
</pallas_src>

<mosaic_0001>
module attributes {stable_mosaic.version = 11 : i64} {
  func.func @_linear_kernel(%arg0: i32, %arg1: memref<16x32xf32, #tpu.memory_space<vmem>>, %arg2: memref<32x32xbf16, #tpu.memory_space<vmem>>, %arg3: memref<1x32xf32, #tpu.memory_space<vmem>>, %arg4: memref<16x32xf32, #tpu.memory_space<vmem>>) attributes {dimension_semantics = [#tpu.dimension_semantics<parallel>], iteration_bounds = array<i64: 1>, scalar_prefetch = 0 : i64, scratch_operands = 0 : i64, tpu.core_type = #tpu.core_type<tc>, window_params = [{transform_indices = @transform_0, window_bounds = array<i64: 16, 32>}, {pipeline_mode = #tpu.pipeline_mode<synchronous>, transform_indices = @transform_1, window_bounds = array<i64: 32, 32>}, {pipeline_mode = #tpu.pipeline_mode<synchronous>, transform_indices = @transform_2, window_bounds = array<i64: 1, 32>}, {transform_indices = @transform_3, window_bounds = array<i64: 16, 32>}]} {
    %c0 = arith.constant 0 : index
    %c0_0 = arith.constant 0 : index
    %0 = vector.load %arg1[%c0, %c0_0] : memref<16x32xf32, #tpu.memory_space<vmem>>, vector<16x32xf32>
    %1 = arith.truncf %0 : vector<16x32xf32> to vector<16x32xbf16>
    %c0_1 = arith.constant 0 : index
    %c0_2 = arith.constant 0 : index
    %2 = vector.load %arg2[%c0_1, %c0_2] : memref<32x32xbf16, #tpu.memory_space<vmem>>, vector<32x32xbf16>
    %cst = arith.constant dense<0.000000e+00> : vector<16x32xf32>
    %3 = tpu.matmul %1, %2, %cst {dimension_numbers = #tpu.dot_dimension_numbers<[1], [0], [0], [1], [0, 0, 1, 1], [], []>} : vector<16x32xbf16>, vector<32x32xbf16>, vector<16x32xf32> -> vector<16x32xf32>
    %c0_3 = arith.constant 0 : index
    %c0_4 = arith.constant 0 : index
    %4 = vector.load %arg3[%c0_3, %c0_4] : memref<1x32xf32, #tpu.memory_space<vmem>>, vector<1x32xf32>
    %5 = vector.broadcast %4 : vector<1x32xf32> to vector<16x32xf32>
    %6 = arith.addf %3, %5 : vector<16x32xf32>
    %c0_5 = arith.constant 0 : index
    %c0_6 = arith.constant 0 : index
    %7 = vector.load %arg4[%c0_5, %c0_6] : memref<16x32xf32, #tpu.memory_space<vmem>>, vector<16x32xf32>
    tpu.vector_store %arg4[%c0_5, %c0_6], %6 {strides = array<i32>} : memref<16x32xf32, #tpu.memory_space<vmem>>, vector<16x32xf32>,
    return
  }
  func.func @transform_0(%arg0: i32) -> (i32, i32) {
    %c0_i32 = arith.constant 0 : i32
    %c0_i32_0 = arith.constant 0 : i32
    return %arg0, %c0_i32 : i32, i32
  }
  func.func @transform_1(%arg0: i32) -> (i32, i32) {
    %c0_i32 = arith.constant 0 : i32
    %c0_i32_0 = arith.constant 0 : i32
    %c0_i32_1 = arith.constant 0 : i32
    return %c0_i32, %c0_i32_0 : i32, i32
  }
  func.func @transform_2(%arg0: i32) -> (i32, i32) {
    %c0_i32 = arith.constant 0 : i32
    %c0_i32_0 = arith.constant 0 : i32
    %c0_i32_1 = arith.constant 0 : i32
    return %c0_i32, %c0_i32_0 : i32, i32
  }
  func.func @transform_3(%arg0: i32) -> (i32, i32) {
    %c0_i32 = arith.constant 0 : i32
    %c0_i32_0 = arith.constant 0 : i32
    return %arg0, %c0_i32 : i32, i32
  }
}

</mosaic_0001>

<llo_original>
// kernel: tpu_custom_call.1
$region0: #{tpu_custom_call.1}
  #allocation0 [shape = 'u32[]', space=smem, size = 0x4, offset = 0x4, fixed_abs, tag = 'smem constant byte address 0x4 - core index']
  #allocation1 [shape = 'u32[72,128]{1,0:T(1,128)}', space=vmem, size = 0x9000, scoped, tag = 'internal scratch']
  %s0 = inlined_call_operand.hbm [shape: f32[16,32], index: 0, kind: input, shape index: {}]
  %s1 = inlined_call_operand.hbm [shape: bf16[32,32], index: 1, kind: input, shape index: {}]
  %s2 = inlined_call_operand.vmem [shape: f32[1,32], index: 2, kind: input, shape index: {}]
  %s3 = inlined_call_operand.hbm [shape: f32[16,32], index: 3, kind: output, shape index: {}]
  %s4 = sld [smem:[#allocation0]]
  $region30: #{tpu_custom_call.1} parent=0
    _
  %s6 = ssub.s32 1, %s4
  %s7 = scalar_select 0, %s6, %s4
  $region1: #{tpu_custom_call.1} parent=0
    #allocation2 [shape = 'u8[8192]{0}', space=vmem, size = 0x2000, scoped, tag = 'input window, operand 0, single buffered']
    #allocation3 [shape = 's32[1]{0}', space=sflag, size = 0x4, scoped, tag = 'scoped memory for tpu_custom_call.1']
    #allocation4 [shape = 's32[1]{0}', space=sflag, size = 0x4, scoped, tag = 'scoped memory for tpu_custom_call.1']
    #allocation5 [shape = 'u8[8192]{0}', space=vmem, size = 0x2000, scoped, tag = 'input window, operand 1, single buffered']
    #allocation6 [shape = 's32[1]{0}', space=sflag, size = 0x4, scoped, tag = 'scoped memory for tpu_custom_call.1']
    #allocation7 [shape = 'u8[8192]{0}', space=vmem, size = 0x2000, scoped, tag = 'output window, operand 0, single buffered']
    %8 = vsyncpa [#allocation3], 0
    %9 = vsyncpa [#allocation6], 0
    %10 = vsyncpa [#allocation4], 0
    // Predicated region
    $region2: #{tpu_custom_call.1} parent=1 // pred_check
      _
    $region3: #{tpu_custom_call.1} parent=1 // pred_check_branch
      %12 = sbr.rel (0) target = $region5
    $region4: #{tpu_custom_call.1} parent=1 // pred_region
      %14 = vsyncadd [#allocation3], 0
      %s15 = sshll.u32 %s0, 4
      %s16 = int_to_ptr.hbm [resolvable:$true] %s15
      %s17 = sshll.u32 [#allocation2], 4
      %s18 = int_to_ptr.vmem [resolvable:$true] %s17
      %23 = dma.hbm_to_vmem [thread:$0]  %s16, 256, %s18, [#allocation3], 128, 128, 8
    $region5: #{tpu_custom_call.1} parent=1 // pred_fallthru
      _
    // Predicated region
    $region6: #{tpu_custom_call.1} parent=1 // pred_check
      _
    $region7: #{tpu_custom_call.1} parent=1 // pred_check_branch
      %25 = sbr.rel (0) target = $region9
    $region8: #{tpu_custom_call.1} parent=1 // pred_region
      %27 = vsyncadd [#allocation6], 0
      %s28 = sshll.u32 %s1, 4
      %s29 = int_to_ptr.hbm [resolvable:$true] %s28
      %s30 = sshll.u32 [#allocation5], 4
      %s31 = int_to_ptr.vmem [resolvable:$true] %s30
      %36 = dma.hbm_to_vmem [thread:$0]  %s29, 256, %s31, [#allocation6], 64, 64, 4
    $region9: #{tpu_custom_call.1} parent=1 // pred_fallthru
      _
    // Predicated region
    $region10: #{tpu_custom_call.1} parent=1 // pred_check
      _
    $region11: #{tpu_custom_call.1} parent=1 // pred_check_branch
      %38 = sbr.rel (0) target = $region13
    $region12: #{tpu_custom_call.1} parent=1 // pred_region
      _
    $region13: #{tpu_custom_call.1} parent=1 // pred_fallthru
      _
    // Predicated region
    $region14: #{tpu_custom_call.1} parent=1 // pred_check
      _
    $region15: #{tpu_custom_call.1} parent=1 // pred_check_branch
      %40 = sbr.rel (0) target = $region17
    $region16: #{tpu_custom_call.1} parent=1 // pred_region
      %42 = dma.done [#allocation3], 256
    $region17: #{tpu_custom_call.1} parent=1 // pred_fallthru
      _
    // Predicated region
    $region18: #{tpu_custom_call.1} parent=1 // pred_check
      _
    $region19: #{tpu_custom_call.1} parent=1 // pred_check_branch
      %44 = sbr.rel (0) target = $region21
    $region20: #{tpu_custom_call.1} parent=1 // pred_region
      %46 = dma.done [#allocation6], 256
    $region21: #{tpu_custom_call.1} parent=1 // pred_fallthru
      _
    %v48 = vld [vmem:[#allocation2] sm:$0xff]
    %v49 = vld [vmem:[#allocation2 + $0x8] sm:$0xff]
    %v50 = vpack.c.bf16 %v49, %v48
    %v51 = vld [vmem:[#allocation5] sm:$0xf]
    %v52 = vld [vmem:[#allocation5 + $0x4] sm:$0xf]
    %v53 = vld [vmem:[#allocation5 + $0x8] sm:$0xf]
    %v54 = vld [vmem:[#allocation5 + $0xc] sm:$0xf]
    %v55 = vld [vmem:[%s2] sm:$0x1]
    %v57 = vperm.slane %v55, 0
    %v63 = vunpack.c.l.b16 %v51
    %v64 = vunpack.c.l.b16 %v52
    %v65 = vunpack.c.l.b16 %v53
    %v66 = vunpack.c.l.b16 %v54
    %v67 = vpack.c.b16 %v64, %v63
    %v68 = vpack.c.b16 %v66, %v65
    %vm71 = vcmask 261120
    %v73 = vsel %vm71, %v50, 0
    %75 = vmatpush.bf16.msra.mxu0 0
    %76 = vmatpush.bf16.msra.mxu0 0
    %77 = vmatpush.bf16.msra.mxu0 0
    %78 = vmatpush.bf16.msra.mxu0 0
    %79 = vmatpush.bf16.msra.mxu0 0
    %80 = vmatpush.bf16.msra.mxu0 0
    %81 = vmatpush.bf16.msra.mxu0 %v68
    %82 = vmatpush.bf16.msra.mxu0 %v67
    %83 = vmatmul.bf16.gmra.mxu0 %v73
    %v84 = vpop.f32.mrf.mxu0
    %v85 = vadd.f32 %v57, %v84
    %v86 = vpop.f32.mrf.mxu0
    %v87 = vadd.f32 %v57, %v86
    %88 = vdwg.mxu0
    %89 = vst.msk [vmem:[#allocation7] sm:$0xff] %vm71, %v85
    %90 = vst.msk [vmem:[#allocation7 + $0x8] sm:$0xff] %vm71, %v87
    // Predicated region
    $region22: #{tpu_custom_call.1} parent=1 // pred_check
      _
    $region23: #{tpu_custom_call.1} parent=1 // pred_check_branch
      %92 = sbr.rel (0) target = $region25
    $region24: #{tpu_custom_call.1} parent=1 // pred_region
      %94 = vsyncadd [#allocation4], 0
      %s95 = sshll.u32 [#allocation7], 4
      %s96 = int_to_ptr.vmem [resolvable:$true] %s95
      %s97 = sshll.u32 %s3, 4
      %s98 = int_to_ptr.hbm [resolvable:$true] %s97
      %103 = dma.vmem_to_hbm [thread:$0]  %s96, 256, %s98, [#allocation4], 128, 128, 8
    $region25: #{tpu_custom_call.1} parent=1 // pred_fallthru
      _
    // Predicated region
    $region26: #{tpu_custom_call.1} parent=1 // pred_check
      _
    $region27: #{tpu_custom_call.1} parent=1 // pred_check_branch
      %105 = sbr.rel (0) target = $region29
    $region28: #{tpu_custom_call.1} parent=1 // pred_region
      %107 = dma.done [#allocation4], 256
    $region29: #{tpu_custom_call.1} parent=1 // pred_fallthru
      _
    %108 = vsyncpa [#allocation3], 1
    %109 = vsyncpa [#allocation6], 1
    %110 = vsyncpa [#allocation4], 1

</llo_original>
